<compile_context>
chip_gen: v5e
topology: v5e:2x2
jax: 0.10.0
libtpu: 0.0.40
codegen_flags: <defaults>
</compile_context>

<pallas_src>
import functools
import math

import jax
import jax.numpy as jnp
from jax.experimental import pallas as pl
from jax.experimental.pallas import tpu as pltpu


def _round_up(x: int, m: int) -> int:
    return (x + m - 1) // m * m


def _erf_poly(x):
    """Abramowitz & Stegun 7.1.26 erf approximation (max abs err ~1.5e-7).

    Only abs/select/mul/add/exp/divide, all of which lower cleanly in Mosaic.
    sign(x)*y is replaced by a single select to save VALU ops. The exact divide
    is kept (its reciprocal already lands on the EUP); pl.reciprocal(approx=True)
    was evaluated but its larger relative error risks drifting the GELU away
    from PyTorch's exact-erf beyond our tolerance.
    """
    a1, a2, a3, a4, a5 = (0.254829592, -0.284496736, 1.421413741,
                          -1.453152027, 1.061405429)
    p = 0.3275911
    ax = jnp.abs(x)
    t = 1.0 / (1.0 + p * ax)
    poly = ((((a5 * t + a4) * t + a3) * t + a2) * t + a1) * t
    y = 1.0 - poly * jnp.exp(-ax * ax)
    return jnp.where(x >= 0.0, y, -y)


def _classifier_head_kernel(x_ref, w1_ref, b1_ref, w2_ref, b2_ref, o_ref, *, eps):
    # x_ref: (tm, D)   w1_ref: (D, D) bf16   b1_ref: (1, D) f32
    # w2_ref: (D, Np) bf16   b2_ref: (1, Np) f32   o_ref: (tm, Np) f32
    x = x_ref[...].astype(jnp.float32)

    # LayerNorm 1 (elementwise_affine=False) — f32 VPU math.
    mu = jnp.mean(x, axis=-1, keepdims=True)
    xc = x - mu
    var = jnp.mean(xc * xc, axis=-1, keepdims=True)
    xn = xc * jax.lax.rsqrt(var + eps)

    # Linear 1 (D -> D): bf16 operands on the MXU, f32 accumulation.
    h = jnp.dot(xn.astype(w1_ref.dtype), w1_ref[...],
                preferred_element_type=jnp.float32)
    h = h + b1_ref[...].astype(jnp.float32)

    # Exact GELU (matches torch.nn.GELU() default). exp hits the EUP slot.
    g = 0.5 * h * (1.0 + _erf_poly(h * (1.0 / math.sqrt(2.0))))

    # LayerNorm 2 (elementwise_affine=False).
    mu2 = jnp.mean(g, axis=-1, keepdims=True)
    gc = g - mu2
    var2 = jnp.mean(gc * gc, axis=-1, keepdims=True)
    gn = gc * jax.lax.rsqrt(var2 + eps)

    # Dropout is identity at inference.
    # TODO(synk): training-mode dropout via pltpu.prng_seed + pltpu.prng_random_bits.

    # Linear 2 (D -> num_labels, lane-padded to Np): bf16 MXU, f32 accumulation.
    out = jnp.dot(gn.astype(w2_ref.dtype), w2_ref[...],
                  preferred_element_type=jnp.float32)
    o_ref[...] = (out + b2_ref[...].astype(jnp.float32)).astype(o_ref.dtype)


def classifier_head_forward(encodings, w1, b1, w2, b2, *, eps=1e-5,
                            matmul_dtype=jnp.bfloat16,
                            single_buffer_weights=True):
    """Fused classifier head.

    encodings: (B, S, D)
    w1: (D, D)  -- (in, out), transpose of torch nn.Linear.weight
    b1: (D,)
    w2: (D, L)  -- (in, out)
    b2: (L,)
    returns logits: (B, S, L) in float32.

    matmul_dtype=jnp.bfloat16 runs the two matmuls on the MXU in bf16 with f32
    accumulation (standard mixed precision); pass jnp.float32 for exact-f32
    parity with the PyTorch module.
    """
    B, S, D = encodings.shape
    L = w2.shape[1]
    assert w1.shape == (D, D) and b1.shape == (D,)
    assert w2.shape == (D, L) and b2.shape == (L,)

    M = B * S
    x = encodings.reshape(M, D)

    # Only pad rows in the rare M % 8 != 0 case (<= 7 rows). The common path
    # streams the activation slab straight from HBM with no wrapper-side copy.
    pad_rows = (-M) % 8
    if pad_rows:
        x = jnp.pad(x, ((0, pad_rows), (0, 0)))
    Mp = M + pad_rows

    # Lane-dense output: pad num_labels to exactly the next multiple of 128.
    Np = _round_up(max(L, 128), 128)
    w1c = w1.astype(matmul_dtype)
    w2p = jnp.pad(w2, ((0, 0), (0, Np - L))).astype(matmul_dtype)
    b1r = b1.astype(jnp.float32).reshape(1, D)
    b2p = jnp.pad(b2.astype(jnp.float32), ((0, Np - L),)).reshape(1, Np)

    # Generation-aware VMEM budget (128 MiB on v5e/v6e, 64 MiB per TC on v7x).
    try:
        vmem_cap = int(pltpu.get_tpu_info().vmem_capacity_bytes)
    except Exception:
        vmem_cap = 64 * 1024 * 1024  # safe lower bound for all generations
    vmem_limit = int(0.8 * vmem_cap)

    in_itemsize = jnp.dtype(encodings.dtype).itemsize
    w_itemsize = jnp.dtype(matmul_dtype).itemsize
    w_bufs = 1 if single_buffer_weights else 2
    weight_bytes = (D * D + D * Np) * w_itemsize * w_bufs + 2 * (D + Np) * 4

    # Largest row tile dividing Mp that fits the budget. Bigger tiles amortize
    # the ~0.35us/grid-step overhead; weights are grid-invariant so only the
    # activation/output tiles scale with tm.
    divisors = [c for c in (1024, 512, 256, 128, 64, 32, 16, 8) if Mp % c == 0]
    tm = divisors[-1]
    for cand in divisors:
        need = (weight_bytes
                + 2 * cand * D * in_itemsize   # double-buffered input tile
                + 2 * cand * Np * 4            # double-buffered f32 output tile
                + 4 * cand * D * 4)            # f32 intermediates headroom
        if need <= int(0.7 * vmem_limit):
            tm = cand
            break
    # TODO(synk): for very large D (resident w1 alone ~ VMEM, mainly v7x 64 MiB),
    # tile w1 over its output-feature dim with an inner pltpu.emit_pipeline
    # instead of requiring the full (D, D) weight resident.

    grid = (Mp // tm,)
    cost = pl.CostEstimate(
        flops=2 * M * D * D + 2 * M * D * Np,
        transcendentals=M * D,
        bytes_accessed=int(M * D * in_itemsize + (D * D + D * Np) * w_itemsize
                           + (D + Np) * 4 + M * Np * 4),
    )
    kernel = functools.partial(_classifier_head_kernel, eps=float(eps))

    def _call(single_buf):
        # Weights/biases: constant block index -> VMEM-resident across the
        # M grid axis; single-buffer the big ones to halve their footprint.
        wkw = dict(pipeline_mode=pl.Buffered(1)) if single_buf else {}
        return pl.pallas_call(
            kernel,
            out_shape=jax.ShapeDtypeStruct((Mp, Np), jnp.float32),
            grid_spec=pltpu.PrefetchScalarGridSpec(
                num_scalar_prefetch=0,
                grid=grid,
                in_specs=[
                    pl.BlockSpec((tm, D), lambda i: (i, 0)),
                    pl.BlockSpec((D, D), lambda i: (0, 0), **wkw),
                    pl.BlockSpec((1, D), lambda i: (0, 0)),
                    pl.BlockSpec((D, Np), lambda i: (0, 0), **wkw),
                    pl.BlockSpec((1, Np), lambda i: (0, 0)),
                ],
                out_specs=pl.BlockSpec((tm, Np), lambda i: (i, 0)),
            ),
            compiler_params=pltpu.CompilerParams(
                # Row axis is embarrassingly parallel -> megacore sharding.
                dimension_semantics=("parallel",),
                vmem_limit_bytes=vmem_limit,
            ),
            cost_estimate=cost,
        )(x, w1c, b1r, w2p, b2p)

    try:
        out_padded = _call(single_buffer_weights)
    except Exception:
        if not single_buffer_weights:
            raise
        # pl.Buffered(1) unsupported on this jax/backend: fall back to default
        # double-buffered weights (numerics identical).
        out_padded = _call(False)

    return out_padded[:M, :L].reshape(B, S, L)


if __name__ == "__main__":
    B, S, D, L = 2, 8, 32, 4
    eps = 1e-5

    key = jax.random.PRNGKey(0)
    k1, k2, k3, k4, k5 = jax.random.split(key, 5)
    enc = jax.random.normal(k1, (B, S, D), dtype=jnp.float32)
    w1 = jax.random.normal(k2, (D, D), dtype=jnp.float32) * (1.0 / math.sqrt(D))
    b1 = jax.random.normal(k3, (D,), dtype=jnp.float32) * 0.02
    w2 = jax.random.normal(k4, (D, L), dtype=jnp.float32) * (1.0 / math.sqrt(D))
    b2 = jax.random.normal(k5, (L,), dtype=jnp.float32) * 0.02

    out = classifier_head_forward(enc, w1, b1, w2, b2, eps=eps)
    out = jax.block_until_ready(out)
    assert out.shape == (B, S, L), out.shape
    assert out.dtype == jnp.float32, out.dtype

    # Pure-JAX references mirroring the PyTorch module (eval mode).
    def reference(x, mm_dtype):
        def ln(v):
            mu = jnp.mean(v, axis=-1, keepdims=True)
            var = jnp.mean((v - mu) ** 2, axis=-1, keepdims=True)
            return (v - mu) * jax.lax.rsqrt(var + eps)
        h = jnp.dot(ln(x).astype(mm_dtype), w1.astype(mm_dtype),
                    preferred_element_type=jnp.float32) + b1
        g = jax.nn.gelu(h, approximate=False)
        return jnp.dot(ln(g).astype(mm_dtype), w2.astype(mm_dtype),
                       preferred_element_type=jnp.float32) + b2

    # (1) Same mixed-precision recipe as the kernel -> tight structural check.
    err_matched = float(jnp.max(jnp.abs(out - reference(enc, jnp.bfloat16))))
    assert err_matched < 5e-3, f"matched-precision max abs error {err_matched}"
    # (2) Full-f32 PyTorch-equivalent reference -> bf16-matmul tolerance.
    err_f32 = float(jnp.max(jnp.abs(out - reference(enc, jnp.float32))))
    assert err_f32 < 5e-2, f"f32-reference max abs error {err_f32}"

    print("KERNEL_OK")
</pallas_src>

<mosaic_0001>
module attributes {stable_mosaic.version = 11 : i64} {
  func.func @_classifier_head_kernel(%arg0: i32, %arg1: memref<16x32xf32, #tpu.memory_space<vmem>>, %arg2: memref<32x32xbf16, #tpu.memory_space<vmem>>, %arg3: memref<1x32xf32, #tpu.memory_space<vmem>>, %arg4: memref<32x128xbf16, #tpu.memory_space<vmem>>, %arg5: memref<1x128xf32, #tpu.memory_space<vmem>>, %arg6: memref<16x128xf32, #tpu.memory_space<vmem>>) attributes {dimension_semantics = [#tpu.dimension_semantics<parallel>], iteration_bounds = array<i64: 1>, scalar_prefetch = 0 : i64, scratch_operands = 0 : i64, tpu.core_type = #tpu.core_type<tc>, window_params = [{transform_indices = @transform_0, window_bounds = array<i64: 16, 32>}, {pipeline_mode = #tpu.pipeline_mode<synchronous>, transform_indices = @transform_1, window_bounds = array<i64: 32, 32>}, {pipeline_mode = #tpu.pipeline_mode<synchronous>, transform_indices = @transform_2, window_bounds = array<i64: 1, 32>}, {pipeline_mode = #tpu.pipeline_mode<synchronous>, transform_indices = @transform_3, window_bounds = array<i64: 32, 128>}, {pipeline_mode = #tpu.pipeline_mode<synchronous>, transform_indices = @transform_4, window_bounds = array<i64: 1, 128>}, {transform_indices = @transform_5, window_bounds = array<i64: 16, 128>}]} {
    %c0 = arith.constant 0 : index
    %c0_0 = arith.constant 0 : index
    %0 = vector.load %arg1[%c0, %c0_0] : memref<16x32xf32, #tpu.memory_space<vmem>>, vector<16x32xf32>
    %cst = arith.constant dense<0.000000e+00> : vector<16xf32>
    %1 = vector.multi_reduction <add>, %0, %cst [1] : vector<16x32xf32> to vector<16xf32>
    %2 = vector.shape_cast %1 : vector<16xf32> to vector<16x1xf32>
    %cst_1 = arith.constant 3.200000e+01 : f32
    %3 = vector.broadcast %cst_1 : f32 to vector<16x1xf32>
    %4 = arith.divf %2, %3 : vector<16x1xf32>
    %5 = vector.broadcast %4 : vector<16x1xf32> to vector<16x32xf32>
    %6 = arith.subf %0, %5 : vector<16x32xf32>
    %7 = arith.mulf %6, %6 : vector<16x32xf32>
    %cst_2 = arith.constant dense<0.000000e+00> : vector<16xf32>
    %8 = vector.multi_reduction <add>, %7, %cst_2 [1] : vector<16x32xf32> to vector<16xf32>
    %9 = vector.shape_cast %8 : vector<16xf32> to vector<16x1xf32>
    %cst_3 = arith.constant 3.200000e+01 : f32
    %10 = vector.broadcast %cst_3 : f32 to vector<16x1xf32>
    %11 = arith.divf %9, %10 : vector<16x1xf32>
    %cst_4 = arith.constant 9.99999974E-6 : f32
    %12 = vector.broadcast %cst_4 : f32 to vector<16x1xf32>
    %13 = arith.addf %11, %12 : vector<16x1xf32>
    %14 = math.rsqrt %13 : vector<16x1xf32>
    %15 = vector.broadcast %14 : vector<16x1xf32> to vector<16x32xf32>
    %16 = arith.mulf %6, %15 : vector<16x32xf32>
    %17 = arith.truncf %16 : vector<16x32xf32> to vector<16x32xbf16>
    %c0_5 = arith.constant 0 : index
    %c0_6 = arith.constant 0 : index
    %18 = vector.load %arg2[%c0_5, %c0_6] : memref<32x32xbf16, #tpu.memory_space<vmem>>, vector<32x32xbf16>
    %cst_7 = arith.constant dense<0.000000e+00> : vector<16x32xf32>
    %19 = tpu.matmul %17, %18, %cst_7 {dimension_numbers = #tpu.dot_dimension_numbers<[1], [0], [0], [1], [0, 0, 1, 1], [], []>} : vector<16x32xbf16>, vector<32x32xbf16>, vector<16x32xf32> -> vector<16x32xf32>
    %c0_8 = arith.constant 0 : index
    %c0_9 = arith.constant 0 : index
    %20 = vector.load %arg3[%c0_8, %c0_9] : memref<1x32xf32, #tpu.memory_space<vmem>>, vector<1x32xf32>
    %21 = vector.broadcast %20 : vector<1x32xf32> to vector<16x32xf32>
    %22 = arith.addf %19, %21 : vector<16x32xf32>
    %cst_10 = arith.constant 5.000000e-01 : f32
    %23 = vector.broadcast %cst_10 : f32 to vector<16x32xf32>
    %24 = arith.mulf %23, %22 : vector<16x32xf32>
    %cst_11 = arith.constant 0.707106769 : f32
    %25 = vector.broadcast %cst_11 : f32 to vector<16x32xf32>
    %26 = arith.mulf %22, %25 : vector<16x32xf32>
    %27 = math.absf %26 : vector<16x32xf32>
    %cst_12 = arith.constant 0.327591091 : f32
    %28 = vector.broadcast %cst_12 : f32 to vector<16x32xf32>
    %29 = arith.mulf %28, %27 : vector<16x32xf32>
    %cst_13 = arith.constant 1.000000e+00 : f32
    %30 = vector.broadcast %cst_13 : f32 to vector<16x32xf32>
    %31 = arith.addf %30, %29 : vector<16x32xf32>
    %cst_14 = arith.constant 1.000000e+00 : f32
    %32 = vector.broadcast %cst_14 : f32 to vector<16x32xf32>
    %33 = arith.divf %32, %31 : vector<16x32xf32>
    %cst_15 = arith.constant 1.06140542 : f32
    %34 = vector.broadcast %cst_15 : f32 to vector<16x32xf32>
    %35 = arith.mulf %34, %33 : vector<16x32xf32>
    %cst_16 = arith.constant -1.45315206 : f32
    %36 = vector.broadcast %cst_16 : f32 to vector<16x32xf32>
    %37 = arith.addf %35, %36 : vector<16x32xf32>
    %38 = arith.mulf %37, %33 : vector<16x32xf32>
    %cst_17 = arith.constant 1.42141378 : f32
    %39 = vector.broadcast %cst_17 : f32 to vector<16x32xf32>
    %40 = arith.addf %38, %39 : vector<16x32xf32>
    %41 = arith.mulf %40, %33 : vector<16x32xf32>
    %cst_18 = arith.constant -0.284496725 : f32
    %42 = vector.broadcast %cst_18 : f32 to vector<16x32xf32>
    %43 = arith.addf %41, %42 : vector<16x32xf32>
    %44 = arith.mulf %43, %33 : vector<16x32xf32>
    %cst_19 = arith.constant 0.254829586 : f32
    %45 = vector.broadcast %cst_19 : f32 to vector<16x32xf32>
    %46 = arith.addf %44, %45 : vector<16x32xf32>
    %47 = arith.mulf %46, %33 : vector<16x32xf32>
    %cst_20 = arith.constant 0.000000e+00 : f32
    %48 = vector.broadcast %cst_20 : f32 to vector<16x32xf32>
    %49 = arith.subf %48, %27 : vector<16x32xf32>
    %50 = arith.mulf %49, %27 : vector<16x32xf32>
    %51 = math.exp %50 : vector<16x32xf32>
    %52 = arith.mulf %47, %51 : vector<16x32xf32>
    %cst_21 = arith.constant 1.000000e+00 : f32
    %53 = vector.broadcast %cst_21 : f32 to vector<16x32xf32>
    %54 = arith.subf %53, %52 : vector<16x32xf32>
    %cst_22 = arith.constant 0.000000e+00 : f32
    %55 = vector.broadcast %cst_22 : f32 to vector<16x32xf32>
    %56 = arith.cmpf oge, %26, %55 : vector<16x32xf32>
    %cst_23 = arith.constant 0.000000e+00 : f32
    %57 = vector.broadcast %cst_23 : f32 to vector<16x32xf32>
    %58 = arith.subf %57, %54 : vector<16x32xf32>
    %59 = arith.select %56, %54, %58 : vector<16x32xi1>, vector<16x32xf32>
    %cst_24 = arith.constant 1.000000e+00 : f32
    %60 = vector.broadcast %cst_24 : f32 to vector<16x32xf32>
    %61 = arith.addf %60, %59 : vector<16x32xf32>
    %62 = arith.mulf %24, %61 : vector<16x32xf32>
    %cst_25 = arith.constant dense<0.000000e+00> : vector<16xf32>
    %63 = vector.multi_reduction <add>, %62, %cst_25 [1] : vector<16x32xf32> to vector<16xf32>
    %64 = vector.shape_cast %63 : vector<16xf32> to vector<16x1xf32>
    %cst_26 = arith.constant 3.200000e+01 : f32
    %65 = vector.broadcast %cst_26 : f32 to vector<16x1xf32>
    %66 = arith.divf %64, %65 : vector<16x1xf32>
    %67 = vector.broadcast %66 : vector<16x1xf32> to vector<16x32xf32>
    %68 = arith.subf %62, %67 : vector<16x32xf32>
    %69 = arith.mulf %68, %68 : vector<16x32xf32>
    %cst_27 = arith.constant dense<0.000000e+00> : vector<16xf32>
    %70 = vector.multi_reduction <add>, %69, %cst_27 [1] : vector<16x32xf32> to vector<16xf32>
    %71 = vector.shape_cast %70 : vector<16xf32> to vector<16x1xf32>
    %cst_28 = arith.constant 3.200000e+01 : f32
    %72 = vector.broadcast %cst_28 : f32 to vector<16x1xf32>
    %73 = arith.divf %71, %72 : vector<16x1xf32>
    %cst_29 = arith.constant 9.99999974E-6 : f32
    %74 = vector.broadcast %cst_29 : f32 to vector<16x1xf32>
    %75 = arith.addf %73, %74 : vector<16x1xf32>
    %76 = math.rsqrt %75 : vector<16x1xf32>
    %77 = vector.broadcast %76 : vector<16x1xf32> to vector<16x32xf32>
    %78 = arith.mulf %68, %77 : vector<16x32xf32>
    %79 = arith.truncf %78 : vector<16x32xf32> to vector<16x32xbf16>
    %c0_30 = arith.constant 0 : index
    %c0_31 = arith.constant 0 : index
    %80 = vector.load %arg4[%c0_30, %c0_31] : memref<32x128xbf16, #tpu.memory_space<vmem>>, vector<32x128xbf16>
    %cst_32 = arith.constant dense<0.000000e+00> : vector<16x128xf32>
    %81 = tpu.matmul %79, %80, %cst_32 {dimension_numbers = #tpu.dot_dimension_numbers<[1], [0], [0], [1], [0, 0, 1, 1], [], []>} : vector<16x32xbf16>, vector<32x128xbf16>, vector<16x128xf32> -> vector<16x128xf32>
    %c0_33 = arith.constant 0 : index
    %c0_34 = arith.constant 0 : index
    %82 = vector.load %arg5[%c0_33, %c0_34] : memref<1x128xf32, #tpu.memory_space<vmem>>, vector<1x128xf32>
    %83 = vector.broadcast %82 : vector<1x128xf32> to vector<16x128xf32>
    %84 = arith.addf %81, %83 : vector<16x128xf32>
    %c0_35 = arith.constant 0 : index
    %c0_36 = arith.constant 0 : index
    %85 = vector.load %arg6[%c0_35, %c0_36] : memref<16x128xf32, #tpu.memory_space<vmem>>, vector<16x128xf32>
    tpu.vector_store %arg6[%c0_35, %c0_36], %84 {strides = array<i32>} : memref<16x128xf32, #tpu.memory_space<vmem>>, vector<16x128xf32>,
    return
  }
  func.func @transform_0(%arg0: i32) -> (i32, i32) {
    %c0_i32 = arith.constant 0 : i32
    %c0_i32_0 = arith.constant 0 : i32
    return %arg0, %c0_i32 : i32, i32
  }
  func.func @transform_1(%arg0: i32) -> (i32, i32) {
    %c0_i32 = arith.constant 0 : i32
    %c0_i32_0 = arith.constant 0 : i32
    %c0_i32_1 = arith.constant 0 : i32
    return %c0_i32, %c0_i32_0 : i32, i32
  }
  func.func @transform_2(%arg0: i32) -> (i32, i32) {
    %c0_i32 = arith.constant 0 : i32
    %c0_i32_0 = arith.constant 0 : i32
    %c0_i32_1 = arith.constant 0 : i32
    return %c0_i32, %c0_i32_0 : i32, i32
  }
  func.func @transform_3(%arg0: i32) -> (i32, i32) {
    %c0_i32 = arith.constant 0 : i32
    %c0_i32_0 = arith.constant 0 : i32
    %c0_i32_1 = arith.constant 0 : i32
    return %c0_i32, %c0_i32_0 : i32, i32
  }
  func.func @transform_4(%arg0: i32) -> (i32, i32) {
    %c0_i32 = arith.constant 0 : i32
    %c0_i32_0 = arith.constant 0 : i32
    %c0_i32_1 = arith.constant 0 : i32
    return %c0_i32, %c0_i32_0 : i32, i32
  }
  func.func @transform_5(%arg0: i32) -> (i32, i32) {
    %c0_i32 = arith.constant 0 : i32
    %c0_i32_0 = arith.constant 0 : i32
    return %arg0, %c0_i32 : i32, i32
  }
}

module attributes {stable_mosaic.version = 11 : i64} {
  func.func @_classifier_head_kernel(%arg0: i32, %arg1: memref<16x32xf32, #tpu.memory_space<vmem>>, %arg2: memref<32x32xbf16, #tpu.memory_space<vmem>>, %arg3: memref<1x32xf32, #tpu.memory_space<vmem>>, %arg4: memref<32x128xbf16, #tpu.memory_space<vmem>>, %arg5: memref<1x128xf32, #tpu.memory_space<vmem>>, %arg6: memref<16x128xf32, #tpu.memory_space<vmem>>) attributes {dimension_semantics = [#tpu.dimension_semantics<parallel>], iteration_bounds = array<i64: 1>, scalar_prefetch = 0 : i64, scratch_operands = 0 : i64, tpu.core_type = #tpu.core_type<tc>, window_params = [{transform_indices = @transform_0, window_bounds = array<i64: 16, 32>}, {pipeline_mode = #tpu.pipeline_mode<synchronous>, transform_indices = @transform_1, window_bounds = array<i64: 32, 32>}, {pipeline_mode = #tpu.pipeline_mode<synchronous>, transform_indices = @transform_2, window_bounds = array<i64: 1, 32>}, {pipeline_mode = #tpu.pipeline_mode<synchronous>, transform_indices = @transform_3, window_bounds = array<i64: 32, 128>}, {pipeline_mode = #tpu.pipeline_mode<synchronous>, transform_indices = @transform_4, window_bounds = array<i64: 1, 128>}, {transform_indices = @transform_5, window_bounds = array<i64: 16, 128>}]} {
    %c0 = arith.constant 0 : index
    %c0_0 = arith.constant 0 : index
    %0 = vector.load %arg1[%c0, %c0_0] : memref<16x32xf32, #tpu.memory_space<vmem>>, vector<16x32xf32>
    %cst = arith.constant dense<0.000000e+00> : vector<16xf32>
    %1 = vector.multi_reduction <add>, %0, %cst [1] : vector<16x32xf32> to vector<16xf32>
    %2 = vector.shape_cast %1 : vector<16xf32> to vector<16x1xf32>
    %cst_1 = arith.constant 3.200000e+01 : f32
    %3 = vector.broadcast %cst_1 : f32 to vector<16x1xf32>
    %4 = arith.divf %2, %3 : vector<16x1xf32>
    %5 = vector.broadcast %4 : vector<16x1xf32> to vector<16x32xf32>
    %6 = arith.subf %0, %5 : vector<16x32xf32>
    %7 = arith.mulf %6, %6 : vector<16x32xf32>
    %cst_2 = arith.constant dense<0.000000e+00> : vector<16xf32>
    %8 = vector.multi_reduction <add>, %7, %cst_2 [1] : vector<16x32xf32> to vector<16xf32>
    %9 = vector.shape_cast %8 : vector<16xf32> to vector<16x1xf32>
    %cst_3 = arith.constant 3.200000e+01 : f32
    %10 = vector.broadcast %cst_3 : f32 to vector<16x1xf32>
    %11 = arith.divf %9, %10 : vector<16x1xf32>
    %cst_4 = arith.constant 9.99999974E-6 : f32
    %12 = vector.broadcast %cst_4 : f32 to vector<16x1xf32>
    %13 = arith.addf %11, %12 : vector<16x1xf32>
    %14 = math.rsqrt %13 : vector<16x1xf32>
    %15 = vector.broadcast %14 : vector<16x1xf32> to vector<16x32xf32>
    %16 = arith.mulf %6, %15 : vector<16x32xf32>
    %17 = arith.truncf %16 : vector<16x32xf32> to vector<16x32xbf16>
    %c0_5 = arith.constant 0 : index
    %c0_6 = arith.constant 0 : index
    %18 = vector.load %arg2[%c0_5, %c0_6] : memref<32x32xbf16, #tpu.memory_space<vmem>>, vector<32x32xbf16>
    %cst_7 = arith.constant dense<0.000000e+00> : vector<16x32xf32>
    %19 = tpu.matmul %17, %18, %cst_7 {dimension_numbers = #tpu.dot_dimension_numbers<[1], [0], [0], [1], [0, 0, 1, 1], [], []>} : vector<16x32xbf16>, vector<32x32xbf16>, vector<16x32xf32> -> vector<16x32xf32>
    %c0_8 = arith.constant 0 : index
    %c0_9 = arith.constant 0 : index
    %20 = vector.load %arg3[%c0_8, %c0_9] : memref<1x32xf32, #tpu.memory_space<vmem>>, vector<1x32xf32>
    %21 = vector.broadcast %20 : vector<1x32xf32> to vector<16x32xf32>
    %22 = arith.addf %19, %21 : vector<16x32xf32>
    %cst_10 = arith.constant 5.000000e-01 : f32
    %23 = vector.broadcast %cst_10 : f32 to vector<16x32xf32>
    %24 = arith.mulf %23, %22 : vector<16x32xf32>
    %cst_11 = arith.constant 0.707106769 : f32
    %25 = vector.broadcast %cst_11 : f32 to vector<16x32xf32>
    %26 = arith.mulf %22, %25 : vector<16x32xf32>
    %27 = math.absf %26 : vector<16x32xf32>
    %cst_12 = arith.constant 0.327591091 : f32
    %28 = vector.broadcast %cst_12 : f32 to vector<16x32xf32>
    %29 = arith.mulf %28, %27 : vector<16x32xf32>
    %cst_13 = arith.constant 1.000000e+00 : f32
    %30 = vector.broadcast %cst_13 : f32 to vector<16x32xf32>
    %31 = arith.addf %30, %29 : vector<16x32xf32>
    %cst_14 = arith.constant 1.000000e+00 : f32
    %32 = vector.broadcast %cst_14 : f32 to vector<16x32xf32>
    %33 = arith.divf %32, %31 : vector<16x32xf32>
    %cst_15 = arith.constant 1.06140542 : f32
    %34 = vector.broadcast %cst_15 : f32 to vector<16x32xf32>
    %35 = arith.mulf %34, %33 : vector<16x32xf32>
    %cst_16 = arith.constant -1.45315206 : f32
    %36 = vector.broadcast %cst_16 : f32 to vector<16x32xf32>
    %37 = arith.addf %35, %36 : vector<16x32xf32>
    %38 = arith.mulf %37, %33 : vector<16x32xf32>
    %cst_17 = arith.constant 1.42141378 : f32
    %39 = vector.broadcast %cst_17 : f32 to vector<16x32xf32>
    %40 = arith.addf %38, %39 : vector<16x32xf32>
    %41 = arith.mulf %40, %33 : vector<16x32xf32>
    %cst_18 = arith.constant -0.284496725 : f32
    %42 = vector.broadcast %cst_18 : f32 to vector<16x32xf32>
    %43 = arith.addf %41, %42 : vector<16x32xf32>
    %44 = arith.mulf %43, %33 : vector<16x32xf32>
    %cst_19 = arith.constant 0.254829586 : f32
    %45 = vector.broadcast %cst_19 : f32 to vector<16x32xf32>
    %46 = arith.addf %44, %45 : vector<16x32xf32>
    %47 = arith.mulf %46, %33 : vector<16x32xf32>
    %cst_20 = arith.constant 0.000000e+00 : f32
    %48 = vector.broadcast %cst_20 : f32 to vector<16x32xf32>
    %49 = arith.subf %48, %27 : vector<16x32xf32>
    %50 = arith.mulf %49, %27 : vector<16x32xf32>
    %51 = math.exp %50 : vector<16x32xf32>
    %52 = arith.mulf %47, %51 : vector<16x32xf32>
    %cst_21 = arith.constant 1.000000e+00 : f32
    %53 = vector.broadcast %cst_21 : f32 to vector<16x32xf32>
    %54 = arith.subf %53, %52 : vector<16x32xf32>
    %cst_22 = arith.constant 0.000000e+00 : f32
    %55 = vector.broadcast %cst_22 : f32 to vector<16x32xf32>
    %56 = arith.cmpf oge, %26, %55 : vector<16x32xf32>
    %cst_23 = arith.constant 0.000000e+00 : f32
    %57 = vector.broadcast %cst_23 : f32 to vector<16x32xf32>
    %58 = arith.subf %57, %54 : vector<16x32xf32>
    %59 = arith.select %56, %54, %58 : vector<16x32xi1>, vector<16x32xf32>
    %cst_24 = arith.constant 1.000000e+00 : f32
    %60 = vector.broadcast %cst_24 : f32 to vector<16x32xf32>
    %61 = arith.addf %60, %59 : vector<16x32xf32>
    %62 = arith.mulf %24, %61 : vector<16x32xf32>
    %cst_25 = arith.constant dense<0.000000e+00> : vector<16xf32>
    %63 = vector.multi_reduction <add>, %62, %cst_25 [1] : vector<16x32xf32> to vector<16xf32>
    %64 = vector.shape_cast %63 : vector<16xf32> to vector<16x1xf32>
    %cst_26 = arith.constant 3.200000e+01 : f32
    %65 = vector.broadcast %cst_26 : f32 to vector<16x1xf32>
    %66 = arith.divf %64, %65 : vector<16x1xf32>
    %67 = vector.broadcast %66 : vector<16x1xf32> to vector<16x32xf32>
    %68 = arith.subf %62, %67 : vector<16x32xf32>
    %69 = arith.mulf %68, %68 : vector<16x32xf32>
    %cst_27 = arith.constant dense<0.000000e+00> : vector<16xf32>
    %70 = vector.multi_reduction <add>, %69, %cst_27 [1] : vector<16x32xf32> to vector<16xf32>
    %71 = vector.shape_cast %70 : vector<16xf32> to vector<16x1xf32>
    %cst_28 = arith.constant 3.200000e+01 : f32
    %72 = vector.broadcast %cst_28 : f32 to vector<16x1xf32>
    %73 = arith.divf %71, %72 : vector<16x1xf32>
    %cst_29 = arith.constant 9.99999974E-6 : f32
    %74 = vector.broadcast %cst_29 : f32 to vector<16x1xf32>
    %75 = arith.addf %73, %74 : vector<16x1xf32>
    %76 = math.rsqrt %75 : vector<16x1xf32>
    %77 = vector.broadcast %76 : vector<16x1xf32> to vector<16x32xf32>
    %78 = arith.mulf %68, %77 : vector<16x32xf32>
    %79 = arith.truncf %78 : vector<16x32xf32> to vector<16x32xbf16>
    %c0_30 = arith.constant 0 : index
    %c0_31 = arith.constant 0 : index
    %80 = vector.load %arg4[%c0_30, %c0_31] : memref<32x128xbf16, #tpu.memory_space<vmem>>, vector<32x128xbf16>
    %cst_32 = arith.constant dense<0.000000e+00> : vector<16x128xf32>
    %81 = tpu.matmul %79, %80, %cst_32 {dimension_numbers = #tpu.dot_dimension_numbers<[1], [0], [0], [1], [0, 0, 1, 1], [], []>} : vector<16x32xbf16>, vector<32x128xbf16>, vector<16x128xf32> -> vector<16x128xf32>
    %c0_33 = arith.constant 0 : index
    %c0_34 = arith.constant 0 : index
    %82 = vector.load %arg5[%c0_33, %c0_34] : memref<1x128xf32, #tpu.memory_space<vmem>>, vector<1x128xf32>
    %83 = vector.broadcast %82 : vector<1x128xf32> to vector<16x128xf32>
    %84 = arith.addf %81, %83 : vector<16x128xf32>
    %c0_35 = arith.constant 0 : index
    %c0_36 = arith.constant 0 : index
    %85 = vector.load %arg6[%c0_35, %c0_36] : memref<16x128xf32, #tpu.memory_space<vmem>>, vector<16x128xf32>
    tpu.vector_store %arg6[%c0_35, %c0_36], %84 {strides = array<i32>} : memref<16x128xf32, #tpu.memory_space<vmem>>, vector<16x128xf32>,
    return
  }
  func.func @transform_0(%arg0: i32) -> (i32, i32) {
    %c0_i32 = arith.constant 0 : i32
    %c0_i32_0 = arith.constant 0 : i32
    return %arg0, %c0_i32 : i32, i32
  }
  func.func @transform_1(%arg0: i32) -> (i32, i32) {
    %c0_i32 = arith.constant 0 : i32
    %c0_i32_0 = arith.constant 0 : i32
    %c0_i32_1 = arith.constant 0 : i32
    return %c0_i32, %c0_i32_0 : i32, i32
  }
  func.func @transform_2(%arg0: i32) -> (i32, i32) {
    %c0_i32 = arith.constant 0 : i32
    %c0_i32_0 = arith.constant 0 : i32
    %c0_i32_1 = arith.constant 0 : i32
    return %c0_i32, %c0_i32_0 : i32, i32
  }
  func.func @transform_3(%arg0: i32) -> (i32, i32) {
    %c0_i32 = arith.constant 0 : i32
    %c0_i32_0 = arith.constant 0 : i32
    %c0_i32_1 = arith.constant 0 : i32
    return %c0_i32, %c0_i32_0 : i32, i32
  }
  func.func @transform_4(%arg0: i32) -> (i32, i32) {
    %c0_i32 = arith.constant 0 : i32
    %c0_i32_0 = arith.constant 0 : i32
    %c0_i32_1 = arith.constant 0 : i32
    return %c0_i32, %c0_i32_0 : i32, i32
  }
  func.func @transform_5(%arg0: i32) -> (i32, i32) {
    %c0_i32 = arith.constant 0 : i32
    %c0_i32_0 = arith.constant 0 : i32
    return %arg0, %c0_i32 : i32, i32
  }
}

</mosaic_0001>

<llo_original>
// kernel: tpu_custom_call.1
$region0: #{tpu_custom_call.1}
  #allocation0 [shape = 'u32[]', space=smem, size = 0x4, offset = 0x4, fixed_abs, tag = 'smem constant byte address 0x4 - core index']
  #allocation1 [shape = 'u32[72,128]{1,0:T(1,128)}', space=vmem, size = 0x9000, scoped, tag = 'internal scratch']
  %s0 = inlined_call_operand.hbm [shape: f32[16,32], index: 0, kind: input, shape index: {}]
  %s1 = inlined_call_operand.hbm [shape: bf16[32,32], index: 1, kind: input, shape index: {}]
  %s2 = inlined_call_operand.vmem [shape: f32[1,32], index: 2, kind: input, shape index: {}]
  %s3 = inlined_call_operand.hbm [shape: bf16[32,128], index: 3, kind: input, shape index: {}]
  %s4 = inlined_call_operand.vmem [shape: f32[1,128], index: 4, kind: input, shape index: {}]
  %s5 = inlined_call_operand.hbm [shape: f32[16,128], index: 5, kind: output, shape index: {}]
  %s6 = sld [smem:[#allocation0]]
  $region42: #{tpu_custom_call.1} parent=0
    _
  %s8 = ssub.s32 1, %s6
  %s9 = scalar_select 0, %s8, %s6
  $region1: #{tpu_custom_call.1} parent=0
    #allocation2 [shape = 'u8[8192]{0}', space=vmem, size = 0x2000, scoped, tag = 'input window, operand 0, single buffered']
    #allocation3 [shape = 's32[1]{0}', space=sflag, size = 0x4, scoped, tag = 'scoped memory for tpu_custom_call.1']
    #allocation4 [shape = 's32[1]{0}', space=sflag, size = 0x4, scoped, tag = 'scoped memory for tpu_custom_call.1']
    #allocation5 [shape = 'u8[8192]{0}', space=vmem, size = 0x2000, scoped, tag = 'input window, operand 1, single buffered']
    #allocation6 [shape = 's32[1]{0}', space=sflag, size = 0x4, scoped, tag = 'scoped memory for tpu_custom_call.1']
    #allocation7 [shape = 'u8[8192]{0}', space=vmem, size = 0x2000, scoped, tag = 'input window, operand 3, single buffered']
    #allocation8 [shape = 'u8[8192]{0}', space=vmem, size = 0x2000, scoped, tag = 'output window, operand 0, single buffered']
    %10 = vsyncpa [#allocation3], 0
    %11 = vsyncpa [#allocation6], 0
    %12 = vsyncpa [#allocation4], 0
    // Predicated region
    $region2: #{tpu_custom_call.1} parent=1 // pred_check
      _
    $region3: #{tpu_custom_call.1} parent=1 // pred_check_branch
      %14 = sbr.rel (0) target = $region5
    $region4: #{tpu_custom_call.1} parent=1 // pred_region
      %16 = vsyncadd [#allocation3], 0
      %s17 = sshll.u32 %s0, 4
      %s18 = int_to_ptr.hbm [resolvable:$true] %s17
      %s19 = sshll.u32 [#allocation2], 4
      %s20 = int_to_ptr.vmem [resolvable:$true] %s19
      %25 = dma.hbm_to_vmem [thread:$0]  %s18, 256, %s20, [#allocation3], 128, 128, 8
    $region5: #{tpu_custom_call.1} parent=1 // pred_fallthru
      _
    // Predicated region
    $region6: #{tpu_custom_call.1} parent=1 // pred_check
      _
    $region7: #{tpu_custom_call.1} parent=1 // pred_check_branch
      %27 = sbr.rel (0) target = $region9
    $region8: #{tpu_custom_call.1} parent=1 // pred_region
      %29 = vsyncadd [#allocation6], 0
      %s30 = sshll.u32 %s1, 4
      %s31 = int_to_ptr.hbm [resolvable:$true] %s30
      %s32 = sshll.u32 [#allocation5], 4
      %s33 = int_to_ptr.vmem [resolvable:$true] %s32
      %38 = dma.hbm_to_vmem [thread:$0]  %s31, 256, %s33, [#allocation6], 64, 64, 4
    $region9: #{tpu_custom_call.1} parent=1 // pred_fallthru
      _
    // Predicated region
    $region10: #{tpu_custom_call.1} parent=1 // pred_check
      _
    $region11: #{tpu_custom_call.1} parent=1 // pred_check_branch
      %40 = sbr.rel (0) target = $region13
    $region12: #{tpu_custom_call.1} parent=1 // pred_region
      _
    $region13: #{tpu_custom_call.1} parent=1 // pred_fallthru
      _
    // Predicated region
    $region14: #{tpu_custom_call.1} parent=1 // pred_check
      _
    $region15: #{tpu_custom_call.1} parent=1 // pred_check_branch
      %42 = sbr.rel (0) target = $region17
    $region16: #{tpu_custom_call.1} parent=1 // pred_region
      %44 = vsyncadd [#allocation6], 0
      %s45 = sshll.u32 %s3, 4
      %s46 = int_to_ptr.hbm [resolvable:$true] %s45
      %s47 = sshll.u32 [#allocation7], 4
      %s48 = int_to_ptr.vmem [resolvable:$true] %s47
      %53 = dma.hbm_to_vmem [thread:$0]  %s46, 256, %s48, [#allocation6], 64, 64, 4
    $region17: #{tpu_custom_call.1} parent=1 // pred_fallthru
      _
    // Predicated region
    $region18: #{tpu_custom_call.1} parent=1 // pred_check
      _
    $region19: #{tpu_custom_call.1} parent=1 // pred_check_branch
      %55 = sbr.rel (0) target = $region21
    $region20: #{tpu_custom_call.1} parent=1 // pred_region
      _
    $region21: #{tpu_custom_call.1} parent=1 // pred_fallthru
      _
    // Predicated region
    $region22: #{tpu_custom_call.1} parent=1 // pred_check
      _
    $region23: #{tpu_custom_call.1} parent=1 // pred_check_branch
      %57 = sbr.rel (0) target = $region25
    $region24: #{tpu_custom_call.1} parent=1 // pred_region
      %59 = dma.done [#allocation3], 256
    $region25: #{tpu_custom_call.1} parent=1 // pred_fallthru
      _
    // Predicated region
    $region26: #{tpu_custom_call.1} parent=1 // pred_check
      _
    $region27: #{tpu_custom_call.1} parent=1 // pred_check_branch
      %61 = sbr.rel (0) target = $region29
    $region28: #{tpu_custom_call.1} parent=1 // pred_region
      %63 = dma.done [#allocation6], 256
    $region29: #{tpu_custom_call.1} parent=1 // pred_fallthru
      _
    // Predicated region
    $region30: #{tpu_custom_call.1} parent=1 // pred_check
      _
    $region31: #{tpu_custom_call.1} parent=1 // pred_check_branch
      %65 = sbr.rel (0) target = $region33
    $region32: #{tpu_custom_call.1} parent=1 // pred_region
      %67 = dma.done [#allocation6], 256
    $region33: #{tpu_custom_call.1} parent=1 // pred_fallthru
      _
    %v69 = vld [vmem:[#allocation2] sm:$0xff]
    %v70 = vld [vmem:[#allocation2 + $0x8] sm:$0xff]
    %vm71 = vcmask 261120
    %v72 = vsel %vm71, %v69, 0.0
    %73 = vadd.xlane.f32.xlu0 %v72
    %v74 = vpop.xlane.xlu0 %73
    %v75 = vsel %vm71, %v70, 0.0
    %76 = vadd.xlane.f32.xlu0 %v75
    %v77 = vpop.xlane.xlu0 %76
    %v78 = vrcp.pop 32.0
    %v79 = vmul.f32 32.0, %v78
    %v80 = vsub.f32 1.0, %v79
    %v81 = vmul.f32 %v78, %v80
    %v82 = vadd.f32 %v78, %v81
    %vm83 = vweird.f32 %v78
    %v84 = vsel %vm83, %v78, %v82
    %v85 = vmul.f32 %v74, %v84
    %v86 = vmul.f32 %v77, %v84
    %v87 = vsub.f32 %v69, %v85
    %v88 = vsub.f32 %v70, %v86
    %v89 = vmul.f32 %v87, %v87
    %v90 = vmul.f32 %v88, %v88
    %v91 = vsel %vm71, %v89, 0.0
    %92 = vadd.xlane.f32.xlu0 %v91
    %v93 = vpop.xlane.xlu0 %92
    %v94 = vsel %vm71, %v90, 0.0
    %95 = vadd.xlane.f32.xlu0 %v94
    %v96 = vpop.xlane.xlu0 %95
    %v97 = vmul.f32 %v93, %v84
    %v98 = vmul.f32 %v96, %v84
    %v99 = vadd.f32 %v97, 1e-05
    %v100 = vadd.f32 %v98, 1e-05
    %v101 = vrsqrt.pop %v99
    %v102 = vmul.f32 %v101, %v99
    %v103 = vmul.f32 %v102, %v101
    %v104 = vmul.f32 0.5, %v103
    %v105 = vsub.f32 1.5, %v104
    %v106 = vmul.f32 %v101, %v105
    %vm107 = vweird.f32 %v99
    %vm108 = vweird.f32 %v101
    %vm109 = vmor %vm107, %vm108
    %v110 = vsel %vm109, %v101, %v106
    %v111 = vrsqrt.pop %v100
    %v112 = vmul.f32 %v111, %v100
    %v113 = vmul.f32 %v112, %v111
    %v114 = vmul.f32 0.5, %v113
    %v115 = vsub.f32 1.5, %v114
    %v116 = vmul.f32 %v111, %v115
    %vm117 = vweird.f32 %v100
    %vm118 = vweird.f32 %v111
    %vm119 = vmor %vm117, %vm118
    %v120 = vsel %vm119, %v111, %v116
    %v121 = vmul.f32 %v87, %v110
    %v122 = vmul.f32 %v88, %v120
    %v123 = vpack.c.bf16 %v122, %v121
    %v124 = vld [vmem:[#allocation5] sm:$0xf]
    %v125 = vld [vmem:[#allocation5 + $0x4] sm:$0xf]
    %v126 = vld [vmem:[#allocation5 + $0x8] sm:$0xf]
    %v127 = vld [vmem:[#allocation5 + $0xc] sm:$0xf]
    %v128 = vld [vmem:[%s2] sm:$0x1]
    %v130 = vperm.slane %v128, 0
    %v136 = vunpack.c.l.b16 %v124
    %v137 = vunpack.c.l.b16 %v125
    %v138 = vunpack.c.l.b16 %v126
    %v139 = vunpack.c.l.b16 %v127
    %v140 = vpack.c.b16 %v137, %v136
    %v141 = vpack.c.b16 %v139, %v138
    %v145 = vsel %vm71, %v123, 0
    %147 = vmatpush.bf16.msra.mxu0 0
    %148 = vmatpush.bf16.msra.mxu0 0
    %149 = vmatpush.bf16.msra.mxu0 0
    %150 = vmatpush.bf16.msra.mxu0 0
    %151 = vmatpush.bf16.msra.mxu0 0
    %152 = vmatpush.bf16.msra.mxu0 0
    %153 = vmatpush.bf16.msra.mxu0 %v141
    %154 = vmatpush.bf16.msra.mxu0 %v140
    %155 = vmatmul.bf16.gmra.mxu0 %v145
    %v156 = vpop.f32.mrf.mxu0
    %v157 = vadd.f32 %v130, %v156
    %v158 = vpop.f32.mrf.mxu0
    %v159 = vadd.f32 %v130, %v158
    %160 = vdwg.mxu0
    %v161 = vmul.f32 %v157, 0.5
    %v162 = vmul.f32 %v159, 0.5
    %v163 = vmul.f32 %v157, 0.70710677
    %v164 = vmul.f32 %v159, 0.70710677
    %v165 = vand.u32 2147483647, %v163
    %v166 = vand.u32 2147483647, %v164
    %v167 = vmul.f32 %v165, 0.3275911
    %v168 = vmul.f32 %v166, 0.3275911
    %v169 = vadd.f32 %v167, 1.0
    %v170 = vadd.f32 %v168, 1.0
    %v171 = vrcp.pop %v169
    %v172 = vmul.f32 %v169, %v171
    %v173 = vsub.f32 1.0, %v172
    %v174 = vmul.f32 %v171, %v173
    %v175 = vadd.f32 %v171, %v174
    %vm176 = vweird.f32 %v169
    %vm177 = vweird.f32 %v171
    %vm178 = vmor %vm176, %vm177
    %v179 = vsel %vm178, %v171, %v175
    %v180 = vand.u32 2147483647, %v169
    %vm181 = vcmp.eq.f32.partialorder %v180, 8.507059e+37
    %v182 = vand.u32 %v169, 2147483648
    %v183 = vor.u32 1.1754944e-38, %v182
    %v184 = vsel %vm181, %v183, %v179
    %v185 = vmul.f32 1.0, %v184
    %v186 = vrcp.pop %v170
    %v187 = vmul.f32 %v170, %v186
    %v188 = vsub.f32 1.0, %v187
    %v189 = vmul.f32 %v186, %v188
    %v190 = vadd.f32 %v186, %v189
    %vm191 = vweird.f32 %v170
    %vm192 = vweird.f32 %v186
    %vm193 = vmor %vm191, %vm192
    %v194 = vsel %vm193, %v186, %v190
    %v195 = vand.u32 2147483647, %v170
    %vm196 = vcmp.eq.f32.partialorder %v195, 8.507059e+37
    %v197 = vand.u32 %v170, 2147483648
    %v198 = vor.u32 1.1754944e-38, %v197
    %v199 = vsel %vm196, %v198, %v194
    %v200 = vmul.f32 1.0, %v199
    %v201 = vmul.f32 %v185, 1.0614054
    %v202 = vmul.f32 %v200, 1.0614054
    %v203 = vadd.f32 %v201, -1.4531521
    %v204 = vadd.f32 %v202, -1.4531521
    %v205 = vmul.f32 %v203, %v185
    %v206 = vmul.f32 %v204, %v200
    %v207 = vadd.f32 %v205, 1.4214138
    %v208 = vadd.f32 %v206, 1.4214138
    %v209 = vmul.f32 %v207, %v185
    %v210 = vmul.f32 %v208, %v200
    %v211 = vadd.f32 %v209, -0.28449672
    %v212 = vadd.f32 %v210, -0.28449672
    %v213 = vmul.f32 %v211, %v185
    %v214 = vmul.f32 %v212, %v200
    %v215 = vadd.f32 %v213, 0.2548296
    %v216 = vadd.f32 %v214, 0.2548296
    %v217 = vmul.f32 %v215, %v185
    %v218 = vmul.f32 %v216, %v200
    %v219 = vsub.f32 0.0, %v165
    %v220 = vsub.f32 0.0, %v166
    %v221 = vmul.f32 %v219, %v165
    %v222 = vmul.f32 %v220, %v166
    %v223 = vmul.f32 %v221, 1.442695
    %v224 = vpow.pop %v223
    %v225 = vmul.f32 %v222, 1.442695
    %v226 = vpow.pop %v225
    %v227 = vmul.f32 %v217, %v224
    %v228 = vmul.f32 %v218, %v226
    %v229 = vsub.f32 1.0, %v227
    %v230 = vsub.f32 1.0, %v228
    %vm231 = vcmp.ge.f32.partialorder %v163, 0.0
    %vm232 = vcmp.ge.f32.partialorder %v164, 0.0
    %v233 = vsub.f32 0.0, %v229
    %v234 = vsub.f32 0.0, %v230
    %v235 = vsel %vm231, %v229, %v233
    %v236 = vsel %vm232, %v230, %v234
    %v237 = vadd.f32 %v235, 1.0
    %v238 = vadd.f32 %v236, 1.0
    %v239 = vmul.f32 %v161, %v237
    %v240 = vmul.f32 %v162, %v238
    %v241 = vsel %vm71, %v239, 0.0
    %242 = vadd.xlane.f32.xlu0 %v241
    %v243 = vpop.xlane.xlu0 %242
    %v244 = vsel %vm71, %v240, 0.0
    %245 = vadd.xlane.f32.xlu0 %v244
    %v246 = vpop.xlane.xlu0 %245
    %v247 = vmul.f32 %v243, %v84
    %v248 = vmul.f32 %v246, %v84
    %v249 = vsub.f32 %v239, %v247
    %v250 = vsub.f32 %v240, %v248
    %v251 = vmul.f32 %v249, %v249
    %v252 = vmul.f32 %v250, %v250
    %v253 = vsel %vm71, %v251, 0.0
    %254 = vadd.xlane.f32.xlu0 %v253
    %v255 = vpop.xlane.xlu0 %254
    %v256 = vsel %vm71, %v252, 0.0
    %257 = vadd.xlane.f32.xlu0 %v256
    %v258 = vpop.xlane.xlu0 %257
    %v259 = vmul.f32 %v255, %v84
    %v260 = vmul.f32 %v258, %v84
    %v261 = vadd.f32 %v259, 1e-05
    %v262 = vadd.f32 %v260, 1e-05
    %v263 = vrsqrt.pop %v261
    %v264 = vmul.f32 %v263, %v261
    %v265 = vmul.f32 %v264, %v263
    %v266 = vmul.f32 0.5, %v265
    %v267 = vsub.f32 1.5, %v266
    %v268 = vmul.f32 %v263, %v267
    %vm269 = vweird.f32 %v261
    %vm270 = vweird.f32 %v263
    %vm271 = vmor %vm269, %vm270
    %v272 = vsel %vm271, %v263, %v268
    %v273 = vrsqrt.pop %v262
    %v274 = vmul.f32 %v273, %v262
    %v275 = vmul.f32 %v274, %v273
    %v276 = vmul.f32 0.5, %v275
    %v277 = vsub.f32 1.5, %v276
    %v278 = vmul.f32 %v273, %v277
    %vm279 = vweird.f32 %v262
    %vm280 = vweird.f32 %v273
    %vm281 = vmor %vm279, %vm280
    %v282 = vsel %vm281, %v273, %v278
    %v283 = vmul.f32 %v249, %v272
    %v284 = vmul.f32 %v250, %v282
    %v285 = vpack.c.bf16 %v284, %v283
    %v286 = vld [vmem:[#allocation7] sm:$0xf]
    %v287 = vld [vmem:[#allocation7 + $0x4] sm:$0xf]
    %v288 = vld [vmem:[#allocation7 + $0x8] sm:$0xf]
    %v289 = vld [vmem:[#allocation7 + $0xc] sm:$0xf]
    %v290 = vld [vmem:[%s4] sm:$0x1]
    %v292 = vperm.slane %v290, 0
    %v298 = vunpack.c.l.b16 %v286
    %v299 = vunpack.c.l.b16 %v287
    %v300 = vunpack.c.l.b16 %v288
    %v301 = vunpack.c.l.b16 %v289
    %v302 = vpack.c.b16 %v299, %v298
    %v303 = vpack.c.b16 %v301, %v300
    %v307 = vsel %vm71, %v285, 0
    %309 = vmatpush.bf16.msra.mxu0 0
    %310 = vmatpush.bf16.msra.mxu0 0
    %311 = vmatpush.bf16.msra.mxu0 0
    %312 = vmatpush.bf16.msra.mxu0 0
    %313 = vmatpush.bf16.msra.mxu0 0
    %314 = vmatpush.bf16.msra.mxu0 0
    %315 = vmatpush.bf16.msra.mxu0 %v303
    %316 = vmatpush.bf16.msra.mxu0 %v302
    %317 = vmatmul.bf16.gmra.mxu0 %v307
    %v318 = vpop.f32.mrf.mxu0
    %v319 = vadd.f32 %v292, %v318
    %v320 = vpop.f32.mrf.mxu0
    %v321 = vadd.f32 %v292, %v320
    %322 = vdwg.mxu0
    %323 = vst [vmem:[#allocation8] sm:$0xff] %v319
    %324 = vst [vmem:[#allocation8 + $0x8] sm:$0xff] %v321
    // Predicated region
    $region34: #{tpu_custom_call.1} parent=1 // pred_check
      _
    $region35: #{tpu_custom_call.1} parent=1 // pred_check_branch
      %326 = sbr.rel (0) target = $region37
    $region36: #{tpu_custom_call.1} parent=1 // pred_region
      %328 = vsyncadd [#allocation4], 0
      %s329 = sshll.u32 [#allocation8], 4
      %s330 = int_to_ptr.vmem [resolvable:$true] %s329
      %s331 = sshll.u32 %s5, 4
      %s332 = int_to_ptr.hbm [resolvable:$true] %s331
      %337 = dma.vmem_to_hbm [thread:$0]  %s330, 256, %s332, [#allocation4], 128, 128, 8
    $region37: #{tpu_custom_call.1} parent=1 // pred_fallthru
      _
    // Predicated region
    $region38: #{tpu_custom_call.1} parent=1 // pred_check
      _
    $region39: #{tpu_custom_call.1} parent=1 // pred_check_branch
      %339 = sbr.rel (0) target = $region41
    $region40: #{tpu_custom_call.1} parent=1 // pred_region
      %341 = dma.done [#allocation4], 256
    $region41: #{tpu_custom_call.1} parent=1 // pred_fallthru
      _
    %342 = vsyncpa [#allocation3], 1
    %343 = vsyncpa [#allocation6], 1
    %344 = vsyncpa [#allocation4], 1

// kernel: tpu_custom_call.1
$region0: #{tpu_custom_call.1}
  #allocation0 [shape = 'u32[]', space=smem, size = 0x4, offset = 0x4, fixed_abs, tag = 'smem constant byte address 0x4 - core index']
  #allocation1 [shape = 'u32[72,128]{1,0:T(1,128)}', space=vmem, size = 0x9000, scoped, tag = 'internal scratch']
  %s0 = inlined_call_operand.hbm [shape: f32[16,32], index: 0, kind: input, shape index: {}]
  %s1 = inlined_call_operand.hbm [shape: bf16[32,32], index: 1, kind: input, shape index: {}]
  %s2 = inlined_call_operand.vmem [shape: f32[1,32], index: 2, kind: input, shape index: {}]
  %s3 = inlined_call_operand.hbm [shape: bf16[32,128], index: 3, kind: input, shape index: {}]
  %s4 = inlined_call_operand.vmem [shape: f32[1,128], index: 4, kind: input, shape index: {}]
  %s5 = inlined_call_operand.hbm [shape: f32[16,128], index: 5, kind: output, shape index: {}]
  %s6 = sld [smem:[#allocation0]]
  $region42: #{tpu_custom_call.1} parent=0
    _
  %s8 = ssub.s32 1, %s6
  %s9 = scalar_select 0, %s8, %s6
  $region1: #{tpu_custom_call.1} parent=0
    #allocation2 [shape = 'u8[8192]{0}', space=vmem, size = 0x2000, scoped, tag = 'input window, operand 0, single buffered']
    #allocation3 [shape = 's32[1]{0}', space=sflag, size = 0x4, scoped, tag = 'scoped memory for tpu_custom_call.1']
    #allocation4 [shape = 's32[1]{0}', space=sflag, size = 0x4, scoped, tag = 'scoped memory for tpu_custom_call.1']
    #allocation5 [shape = 'u8[8192]{0}', space=vmem, size = 0x2000, scoped, tag = 'input window, operand 1, single buffered']
    #allocation6 [shape = 's32[1]{0}', space=sflag, size = 0x4, scoped, tag = 'scoped memory for tpu_custom_call.1']
    #allocation7 [shape = 'u8[8192]{0}', space=vmem, size = 0x2000, scoped, tag = 'input window, operand 3, single buffered']
    #allocation8 [shape = 'u8[8192]{0}', space=vmem, size = 0x2000, scoped, tag = 'output window, operand 0, single buffered']
    %10 = vsyncpa [#allocation3], 0
    %11 = vsyncpa [#allocation6], 0
    %12 = vsyncpa [#allocation4], 0
    // Predicated region
    $region2: #{tpu_custom_call.1} parent=1 // pred_check
      _
    $region3: #{tpu_custom_call.1} parent=1 // pred_check_branch
      %14 = sbr.rel (0) target = $region5
    $region4: #{tpu_custom_call.1} parent=1 // pred_region
      %16 = vsyncadd [#allocation3], 0
      %s17 = sshll.u32 %s0, 4
      %s18 = int_to_ptr.hbm [resolvable:$true] %s17
      %s19 = sshll.u32 [#allocation2], 4
      %s20 = int_to_ptr.vmem [resolvable:$true] %s19
      %25 = dma.hbm_to_vmem [thread:$0]  %s18, 256, %s20, [#allocation3], 128, 128, 8
    $region5: #{tpu_custom_call.1} parent=1 // pred_fallthru
      _
    // Predicated region
    $region6: #{tpu_custom_call.1} parent=1 // pred_check
      _
    $region7: #{tpu_custom_call.1} parent=1 // pred_check_branch
      %27 = sbr.rel (0) target = $region9
    $region8: #{tpu_custom_call.1} parent=1 // pred_region
      %29 = vsyncadd [#allocation6], 0
      %s30 = sshll.u32 %s1, 4
      %s31 = int_to_ptr.hbm [resolvable:$true] %s30
      %s32 = sshll.u32 [#allocation5], 4
      %s33 = int_to_ptr.vmem [resolvable:$true] %s32
      %38 = dma.hbm_to_vmem [thread:$0]  %s31, 256, %s33, [#allocation6], 64, 64, 4
    $region9: #{tpu_custom_call.1} parent=1 // pred_fallthru
      _
    // Predicated region
    $region10: #{tpu_custom_call.1} parent=1 // pred_check
      _
    $region11: #{tpu_custom_call.1} parent=1 // pred_check_branch
      %40 = sbr.rel (0) target = $region13
    $region12: #{tpu_custom_call.1} parent=1 // pred_region
      _
    $region13: #{tpu_custom_call.1} parent=1 // pred_fallthru
      _
    // Predicated region
    $region14: #{tpu_custom_call.1} parent=1 // pred_check
      _
    $region15: #{tpu_custom_call.1} parent=1 // pred_check_branch
      %42 = sbr.rel (0) target = $region17
    $region16: #{tpu_custom_call.1} parent=1 // pred_region
      %44 = vsyncadd [#allocation6], 0
      %s45 = sshll.u32 %s3, 4
      %s46 = int_to_ptr.hbm [resolvable:$true] %s45
      %s47 = sshll.u32 [#allocation7], 4
      %s48 = int_to_ptr.vmem [resolvable:$true] %s47
      %53 = dma.hbm_to_vmem [thread:$0]  %s46, 256, %s48, [#allocation6], 64, 64, 4
    $region17: #{tpu_custom_call.1} parent=1 // pred_fallthru
      _
    // Predicated region
    $region18: #{tpu_custom_call.1} parent=1 // pred_check
      _
    $region19: #{tpu_custom_call.1} parent=1 // pred_check_branch
      %55 = sbr.rel (0) target = $region21
    $region20: #{tpu_custom_call.1} parent=1 // pred_region
      _
    $region21: #{tpu_custom_call.1} parent=1 // pred_fallthru
      _
    // Predicated region
    $region22: #{tpu_custom_call.1} parent=1 // pred_check
      _
    $region23: #{tpu_custom_call.1} parent=1 // pred_check_branch
      %57 = sbr.rel (0) target = $region25
    $region24: #{tpu_custom_call.1} parent=1 // pred_region
      %59 = dma.done [#allocation3], 256
    $region25: #{tpu_custom_call.1} parent=1 // pred_fallthru
      _
    // Predicated region
    $region26: #{tpu_custom_call.1} parent=1 // pred_check
      _
    $region27: #{tpu_custom_call.1} parent=1 // pred_check_branch
      %61 = sbr.rel (0) target = $region29
    $region28: #{tpu_custom_call.1} parent=1 // pred_region
      %63 = dma.done [#allocation6], 256
    $region29: #{tpu_custom_call.1} parent=1 // pred_fallthru
      _
    // Predicated region
    $region30: #{tpu_custom_call.1} parent=1 // pred_check
      _
    $region31: #{tpu_custom_call.1} parent=1 // pred_check_branch
      %65 = sbr.rel (0) target = $region33
    $region32: #{tpu_custom_call.1} parent=1 // pred_region
      %67 = dma.done [#allocation6], 256
    $region33: #{tpu_custom_call.1} parent=1 // pred_fallthru
      _
    %v69 = vld [vmem:[#allocation2] sm:$0xff]
    %v70 = vld [vmem:[#allocation2 + $0x8] sm:$0xff]
    %vm71 = vcmask 261120
    %v72 = vsel %vm71, %v69, 0.0
    %73 = vadd.xlane.f32.xlu0 %v72
    %v74 = vpop.xlane.xlu0 %73
    %v75 = vsel %vm71, %v70, 0.0
    %76 = vadd.xlane.f32.xlu0 %v75
    %v77 = vpop.xlane.xlu0 %76
    %v78 = vrcp.pop 32.0
    %v79 = vmul.f32 32.0, %v78
    %v80 = vsub.f32 1.0, %v79
    %v81 = vmul.f32 %v78, %v80
    %v82 = vadd.f32 %v78, %v81
    %vm83 = vweird.f32 %v78
    %v84 = vsel %vm83, %v78, %v82
    %v85 = vmul.f32 %v74, %v84
    %v86 = vmul.f32 %v77, %v84
    %v87 = vsub.f32 %v69, %v85
    %v88 = vsub.f32 %v70, %v86
    %v89 = vmul.f32 %v87, %v87
    %v90 = vmul.f32 %v88, %v88
    %v91 = vsel %vm71, %v89, 0.0
    %92 = vadd.xlane.f32.xlu0 %v91
    %v93 = vpop.xlane.xlu0 %92
    %v94 = vsel %vm71, %v90, 0.0
    %95 = vadd.xlane.f32.xlu0 %v94
    %v96 = vpop.xlane.xlu0 %95
    %v97 = vmul.f32 %v93, %v84
    %v98 = vmul.f32 %v96, %v84
    %v99 = vadd.f32 %v97, 1e-05
    %v100 = vadd.f32 %v98, 1e-05
    %v101 = vrsqrt.pop %v99
    %v102 = vmul.f32 %v101, %v99
    %v103 = vmul.f32 %v102, %v101
    %v104 = vmul.f32 0.5, %v103
    %v105 = vsub.f32 1.5, %v104
    %v106 = vmul.f32 %v101, %v105
    %vm107 = vweird.f32 %v99
    %vm108 = vweird.f32 %v101
    %vm109 = vmor %vm107, %vm108
    %v110 = vsel %vm109, %v101, %v106
    %v111 = vrsqrt.pop %v100
    %v112 = vmul.f32 %v111, %v100
    %v113 = vmul.f32 %v112, %v111
    %v114 = vmul.f32 0.5, %v113
    %v115 = vsub.f32 1.5, %v114
    %v116 = vmul.f32 %v111, %v115
    %vm117 = vweird.f32 %v100
    %vm118 = vweird.f32 %v111
    %vm119 = vmor %vm117, %vm118
    %v120 = vsel %vm119, %v111, %v116
    %v121 = vmul.f32 %v87, %v110
    %v122 = vmul.f32 %v88, %v120
    %v123 = vpack.c.bf16 %v122, %v121
    %v124 = vld [vmem:[#allocation5] sm:$0xf]
    %v125 = vld [vmem:[#allocation5 + $0x4] sm:$0xf]
    %v126 = vld [vmem:[#allocation5 + $0x8] sm:$0xf]
    %v127 = vld [vmem:[#allocation5 + $0xc] sm:$0xf]
    %v128 = vld [vmem:[%s2] sm:$0x1]
    %v130 = vperm.slane %v128, 0
    %v136 = vunpack.c.l.b16 %v124
    %v137 = vunpack.c.l.b16 %v125
    %v138 = vunpack.c.l.b16 %v126
    %v139 = vunpack.c.l.b16 %v127
    %v140 = vpack.c.b16 %v137, %v136
    %v141 = vpack.c.b16 %v139, %v138
    %v145 = vsel %vm71, %v123, 0
    %147 = vmatpush.bf16.msra.mxu0 0
    %148 = vmatpush.bf16.msra.mxu0 0
    %149 = vmatpush.bf16.msra.mxu0 0
    %150 = vmatpush.bf16.msra.mxu0 0
    %151 = vmatpush.bf16.msra.mxu0 0
    %152 = vmatpush.bf16.msra.mxu0 0
    %153 = vmatpush.bf16.msra.mxu0 %v141
    %154 = vmatpush.bf16.msra.mxu0 %v140
    %155 = vmatmul.bf16.gmra.mxu0 %v145
    %v156 = vpop.f32.mrf.mxu0
    %v157 = vadd.f32 %v130, %v156
    %v158 = vpop.f32.mrf.mxu0
    %v159 = vadd.f32 %v130, %v158
    %160 = vdwg.mxu0
    %v161 = vmul.f32 %v157, 0.5
    %v162 = vmul.f32 %v159, 0.5
    %v163 = vmul.f32 %v157, 0.70710677
    %v164 = vmul.f32 %v159, 0.70710677
    %v165 = vand.u32 2147483647, %v163
    %v166 = vand.u32 2147483647, %v164
    %v167 = vmul.f32 %v165, 0.3275911
    %v168 = vmul.f32 %v166, 0.3275911
    %v169 = vadd.f32 %v167, 1.0
    %v170 = vadd.f32 %v168, 1.0
    %v171 = vrcp.pop %v169
    %v172 = vmul.f32 %v169, %v171
    %v173 = vsub.f32 1.0, %v172
    %v174 = vmul.f32 %v171, %v173
    %v175 = vadd.f32 %v171, %v174
    %vm176 = vweird.f32 %v169
    %vm177 = vweird.f32 %v171
    %vm178 = vmor %vm176, %vm177
    %v179 = vsel %vm178, %v171, %v175
    %v180 = vand.u32 2147483647, %v169
    %vm181 = vcmp.eq.f32.partialorder %v180, 8.507059e+37
    %v182 = vand.u32 %v169, 2147483648
    %v183 = vor.u32 1.1754944e-38, %v182
    %v184 = vsel %vm181, %v183, %v179
    %v185 = vmul.f32 1.0, %v184
    %v186 = vrcp.pop %v170
    %v187 = vmul.f32 %v170, %v186
    %v188 = vsub.f32 1.0, %v187
    %v189 = vmul.f32 %v186, %v188
    %v190 = vadd.f32 %v186, %v189
    %vm191 = vweird.f32 %v170
    %vm192 = vweird.f32 %v186
    %vm193 = vmor %vm191, %vm192
    %v194 = vsel %vm193, %v186, %v190
    %v195 = vand.u32 2147483647, %v170
    %vm196 = vcmp.eq.f32.partialorder %v195, 8.507059e+37
    %v197 = vand.u32 %v170, 2147483648
    %v198 = vor.u32 1.1754944e-38, %v197
    %v199 = vsel %vm196, %v198, %v194
    %v200 = vmul.f32 1.0, %v199
    %v201 = vmul.f32 %v185, 1.0614054
    %v202 = vmul.f32 %v200, 1.0614054
    %v203 = vadd.f32 %v201, -1.4531521
    %v204 = vadd.f32 %v202, -1.4531521
    %v205 = vmul.f32 %v203, %v185
    %v206 = vmul.f32 %v204, %v200
    %v207 = vadd.f32 %v205, 1.4214138
    %v208 = vadd.f32 %v206, 1.4214138
    %v209 = vmul.f32 %v207, %v185
    %v210 = vmul.f32 %v208, %v200
    %v211 = vadd.f32 %v209, -0.28449672
    %v212 = vadd.f32 %v210, -0.28449672
    %v213 = vmul.f32 %v211, %v185
    %v214 = vmul.f32 %v212, %v200
    %v215 = vadd.f32 %v213, 0.2548296
    %v216 = vadd.f32 %v214, 0.2548296
    %v217 = vmul.f32 %v215, %v185
    %v218 = vmul.f32 %v216, %v200
    %v219 = vsub.f32 0.0, %v165
    %v220 = vsub.f32 0.0, %v166
    %v221 = vmul.f32 %v219, %v165
    %v222 = vmul.f32 %v220, %v166
    %v223 = vmul.f32 %v221, 1.442695
    %v224 = vpow.pop %v223
    %v225 = vmul.f32 %v222, 1.442695
    %v226 = vpow.pop %v225
    %v227 = vmul.f32 %v217, %v224
    %v228 = vmul.f32 %v218, %v226
    %v229 = vsub.f32 1.0, %v227
    %v230 = vsub.f32 1.0, %v228
    %vm231 = vcmp.ge.f32.partialorder %v163, 0.0
    %vm232 = vcmp.ge.f32.partialorder %v164, 0.0
    %v233 = vsub.f32 0.0, %v229
    %v234 = vsub.f32 0.0, %v230
    %v235 = vsel %vm231, %v229, %v233
    %v236 = vsel %vm232, %v230, %v234
    %v237 = vadd.f32 %v235, 1.0
    %v238 = vadd.f32 %v236, 1.0
    %v239 = vmul.f32 %v161, %v237
    %v240 = vmul.f32 %v162, %v238
    %v241 = vsel %vm71, %v239, 0.0
    %242 = vadd.xlane.f32.xlu0 %v241
    %v243 = vpop.xlane.xlu0 %242
    %v244 = vsel %vm71, %v240, 0.0
    %245 = vadd.xlane.f32.xlu0 %v244
    %v246 = vpop.xlane.xlu0 %245
    %v247 = vmul.f32 %v243, %v84
    %v248 = vmul.f32 %v246, %v84
    %v249 = vsub.f32 %v239, %v247
    %v250 = vsub.f32 %v240, %v248
    %v251 = vmul.f32 %v249, %v249
    %v252 = vmul.f32 %v250, %v250
    %v253 = vsel %vm71, %v251, 0.0
    %254 = vadd.xlane.f32.xlu0 %v253
    %v255 = vpop.xlane.xlu0 %254
    %v256 = vsel %vm71, %v252, 0.0
    %257 = vadd.xlane.f32.xlu0 %v256
    %v258 = vpop.xlane.xlu0 %257
    %v259 = vmul.f32 %v255, %v84
    %v260 = vmul.f32 %v258, %v84
    %v261 = vadd.f32 %v259, 1e-05
    %v262 = vadd.f32 %v260, 1e-05
    %v263 = vrsqrt.pop %v261
    %v264 = vmul.f32 %v263, %v261
    %v265 = vmul.f32 %v264, %v263
    %v266 = vmul.f32 0.5, %v265
    %v267 = vsub.f32 1.5, %v266
    %v268 = vmul.f32 %v263, %v267
    %vm269 = vweird.f32 %v261
    %vm270 = vweird.f32 %v263
    %vm271 = vmor %vm269, %vm270
    %v272 = vsel %vm271, %v263, %v268
    %v273 = vrsqrt.pop %v262
    %v274 = vmul.f32 %v273, %v262
    %v275 = vmul.f32 %v274, %v273
    %v276 = vmul.f32 0.5, %v275
    %v277 = vsub.f32 1.5, %v276
    %v278 = vmul.f32 %v273, %v277
    %vm279 = vweird.f32 %v262
    %vm280 = vweird.f32 %v273
    %vm281 = vmor %vm279, %vm280
    %v282 = vsel %vm281, %v273, %v278
    %v283 = vmul.f32 %v249, %v272
    %v284 = vmul.f32 %v250, %v282
    %v285 = vpack.c.bf16 %v284, %v283
    %v286 = vld [vmem:[#allocation7] sm:$0xf]
    %v287 = vld [vmem:[#allocation7 + $0x4] sm:$0xf]
    %v288 = vld [vmem:[#allocation7 + $0x8] sm:$0xf]
    %v289 = vld [vmem:[#allocation7 + $0xc] sm:$0xf]
    %v290 = vld [vmem:[%s4] sm:$0x1]
    %v292 = vperm.slane %v290, 0
    %v298 = vunpack.c.l.b16 %v286
    %v299 = vunpack.c.l.b16 %v287
    %v300 = vunpack.c.l.b16 %v288
    %v301 = vunpack.c.l.b16 %v289
    %v302 = vpack.c.b16 %v299, %v298
    %v303 = vpack.c.b16 %v301, %v300
    %v307 = vsel %vm71, %v285, 0
    %309 = vmatpush.bf16.msra.mxu0 0
    %310 = vmatpush.bf16.msra.mxu0 0
    %311 = vmatpush.bf16.msra.mxu0 0
    %312 = vmatpush.bf16.msra.mxu0 0
    %313 = vmatpush.bf16.msra.mxu0 0
    %314 = vmatpush.bf16.msra.mxu0 0
    %315 = vmatpush.bf16.msra.mxu0 %v303
    %316 = vmatpush.bf16.msra.mxu0 %v302
    %317 = vmatmul.bf16.gmra.mxu0 %v307
    %v318 = vpop.f32.mrf.mxu0
    %v319 = vadd.f32 %v292, %v318
    %v320 = vpop.f32.mrf.mxu0
    %v321 = vadd.f32 %v292, %v320
    %322 = vdwg.mxu0
    %323 = vst [vmem:[#allocation8] sm:$0xff] %v319
    %324 = vst [vmem:[#allocation8 + $0x8] sm:$0xff] %v321
    // Predicated region
    $region34: #{tpu_custom_call.1} parent=1 // pred_check
      _
    $region35: #{tpu_custom_call.1} parent=1 // pred_check_branch
      %326 = sbr.rel (0) target = $region37
    $region36: #{tpu_custom_call.1} parent=1 // pred_region
      %328 = vsyncadd [#allocation4], 0
      %s329 = sshll.u32 [#allocation8], 4
      %s330 = int_to_ptr.vmem [resolvable:$true] %s329
      %s331 = sshll.u32 %s5, 4
      %s332 = int_to_ptr.hbm [resolvable:$true] %s331
      %337 = dma.vmem_to_hbm [thread:$0]  %s330, 256, %s332, [#allocation4], 128, 128, 8
    $region37: #{tpu_custom_call.1} parent=1 // pred_fallthru
      _
    // Predicated region
    $region38: #{tpu_custom_call.1} parent=1 // pred_check
      _
    $region39: #{tpu_custom_call.1} parent=1 // pred_check_branch
      %339 = sbr.rel (0) target = $region41
    $region40: #{tpu_custom_call.1} parent=1 // pred_region
      %341 = dma.done [#allocation4], 256
    $region41: #{tpu_custom_call.1} parent=1 // pred_fallthru
      _
    %342 = vsyncpa [#allocation3], 1
    %343 = vsyncpa [#allocation6], 1
    %344 = vsyncpa [#allocation4], 1

</llo_original>
